<compile_context>
chip_gen: v6e
topology: v6e:2x2x1
jax: 0.10.0
libtpu: 0.0.40
codegen_flags: <defaults>
</compile_context>

<pallas_src>
import jax
import jax.numpy as jnp
from jax.experimental import pallas as pl
from jax.experimental.pallas import tpu as pltpu

# ---------------------------------------------------------------------------
# Model hyperparameters (synthetic; deterministic init, no checkpoint load).
# vocab_size would be len(sorted(set(text))) in the original script; we pick a
# TPU-lane-friendly 128 here.
# TODO(synk): for a non-multiple-of-128 vocab (e.g. 65), the table/logits need
# lane padding and the logsumexp/max must mask padded columns with -inf.
VOCAB_SIZE = 128
BATCH = 2
SEQ = 8


def bigram_kernel(ids_ref, tgt_ref, emb_ref, logits_ref, loss_ref):
    """Embedding row-gather + cross-entropy.

    ids_ref    : (N,)  int32   SMEM  token ids
    tgt_ref    : (N,)  int32   SMEM  target ids
    emb_ref    : (V,V) float32 VMEM  embedding table
    logits_ref : (N,V) float32 VMEM  output logits
    loss_ref   : (1,1) float32 SMEM  mean cross-entropy loss
    """
    n, v = logits_ref.shape

    # Lane index vector, hoisted once (used for the per-row target pick).
    lane = jax.lax.broadcasted_iota(jnp.int32, (1, v), 1)      # (1, V)

    # Sum over rows of logits[i, tgt[i]], accumulated lane-wise.
    picked_acc = jnp.zeros((1, v), jnp.float32)

    # N is tiny and static -> fully unrolled scalar-indexed row gather.
    for i in range(n):
        row = emb_ref[pl.ds(ids_ref[i], 1), :]                 # (1, V) dynamic-sublane load
        logits_ref[pl.ds(i, 1), :] = row                       # static-sublane store
        picked_acc = picked_acc + jnp.where(lane == tgt_ref[i], row, 0.0)

    # Cross-entropy: mean over rows of (logsumexp(logits) - logits[target]).
    logits = logits_ref[...]                                   # (N, V)
    m = jnp.max(logits, axis=-1, keepdims=True)                # (N, 1)
    lse = m + jnp.log(jnp.sum(jnp.exp(logits - m), axis=-1, keepdims=True))
    inv_n = jnp.float32(1.0 / n)                               # compile-time constant
    loss_ref[0, 0] = (jnp.sum(lse) - jnp.sum(picked_acc)) * inv_n


def bigram_forward(emb_table, inputs, targets=None):
    """Pallas equivalent of BigramLanguageModel.forward(inputs, targets).

    emb_table      : (V, V) float32
    inputs, targets: (B, T) int32
    returns:
      targets is None -> (logits (B, T, V), None)
      else            -> (logits (B*T, V), loss ())   [matches PyTorch .view(-1, C)]
    """
    b, t = inputs.shape
    v = emb_table.shape[0]
    n = b * t
    ids = inputs.reshape(n).astype(jnp.int32)
    tgt_arr = targets if targets is not None else jnp.zeros_like(inputs)
    tgt = tgt_arr.reshape(n).astype(jnp.int32)

    logits_flat, loss = pl.pallas_call(
        bigram_kernel,
        out_shape=(
            jax.ShapeDtypeStruct((n, v), jnp.float32),
            jax.ShapeDtypeStruct((1, 1), jnp.float32),
        ),
        in_specs=[
            pl.BlockSpec(memory_space=pltpu.MemorySpace.SMEM),   # ids (scalars)
            pl.BlockSpec(memory_space=pltpu.MemorySpace.SMEM),   # targets (scalars)
            pl.BlockSpec(memory_space=pltpu.MemorySpace.VMEM),   # embedding table
        ],
        out_specs=(
            pl.BlockSpec(memory_space=pltpu.MemorySpace.VMEM),   # logits
            pl.BlockSpec(memory_space=pltpu.MemorySpace.SMEM),   # loss scalar
        ),
    )(ids, tgt, emb_table)

    if targets is None:
        return logits_flat.reshape(b, t, v), None
    return logits_flat, loss[0, 0]


if __name__ == "__main__":
    key = jax.random.PRNGKey(0)
    k_emb, k_in, k_tgt = jax.random.split(key, 3)

    # Deterministic synthetic parameters / inputs.
    emb_table = jax.random.normal(k_emb, (VOCAB_SIZE, VOCAB_SIZE), dtype=jnp.float32)
    inputs = jax.random.randint(k_in, (BATCH, SEQ), 0, VOCAB_SIZE, dtype=jnp.int32)
    targets = jax.random.randint(k_tgt, (BATCH, SEQ), 0, VOCAB_SIZE, dtype=jnp.int32)

    # Training-style path (targets given): flat logits + mean cross-entropy.
    logits, loss = bigram_forward(emb_table, inputs, targets)
    jax.block_until_ready((logits, loss))

    # Inference-style path (targets=None): (B, T, V) logits, loss is None.
    logits_gen, loss_none = bigram_forward(emb_table, inputs)
    jax.block_until_ready(logits_gen)

    # Pure-JAX reference check (embedding gather + mean cross-entropy).
    ref_logits = emb_table[inputs]                              # (B, T, V)
    flat = ref_logits.reshape(-1, VOCAB_SIZE)
    tgt_flat = targets.reshape(-1)
    ref_lse = jax.scipy.special.logsumexp(flat, axis=-1)
    ref_loss = jnp.mean(ref_lse - flat[jnp.arange(flat.shape[0]), tgt_flat])

    assert logits.shape == (BATCH * SEQ, VOCAB_SIZE)
    assert jnp.allclose(logits, flat, atol=1e-5), "logits mismatch"
    assert jnp.allclose(loss, ref_loss, atol=1e-5), "loss mismatch"
    assert loss_none is None
    assert logits_gen.shape == (BATCH, SEQ, VOCAB_SIZE)
    assert jnp.allclose(logits_gen, ref_logits, atol=1e-5), "gen logits mismatch"

    # TODO(synk): generate() uses torch.multinomial sampling in a Python loop;
    # sampling/driver loop is host-side glue, not a kernel hot path, so it is
    # not reproduced here.
    print("KERNEL_OK")
</pallas_src>

<mosaic_0001>
module attributes {stable_mosaic.version = 11 : i64} {
  func.func @bigram_kernel(%arg0: memref<16xi32, #tpu.memory_space<smem>>, %arg1: memref<16xi32, #tpu.memory_space<smem>>, %arg2: memref<128x128xf32, #tpu.memory_space<vmem>>, %arg3: memref<16x128xf32, #tpu.memory_space<vmem>>, %arg4: memref<1x1xf32, #tpu.memory_space<smem>>) attributes {dimension_semantics = [], scalar_prefetch = 0 : i64, scratch_operands = 0 : i64, tpu.core_type = #tpu.core_type<tc>} {
    %0 = tpu.iota {dimensions = array<i32: 1>} : vector<1x128xi32>
    %cst = arith.constant 0.000000e+00 : f32
    %1 = vector.broadcast %cst : f32 to vector<1x128xf32>
    %c0 = arith.constant 0 : index
    %2 = memref.load %arg0[%c0] : memref<16xi32, #tpu.memory_space<smem>>
    %3 = arith.index_cast %2 : i32 to index
    %c0_0 = arith.constant 0 : index
    %4 = vector.load %arg2[%3, %c0_0] : memref<128x128xf32, #tpu.memory_space<vmem>>, vector<1x128xf32>
    %c0_1 = arith.constant 0 : index
    %c0_2 = arith.constant 0 : index
    %5 = vector.load %arg3[%c0_1, %c0_2] : memref<16x128xf32, #tpu.memory_space<vmem>>, vector<1x128xf32>
    tpu.vector_store %arg3[%c0_1, %c0_2], %4 {strides = array<i32>} : memref<16x128xf32, #tpu.memory_space<vmem>>, vector<1x128xf32>,
    %c0_3 = arith.constant 0 : index
    %6 = memref.load %arg1[%c0_3] : memref<16xi32, #tpu.memory_space<smem>>
    %7 = vector.broadcast %6 : i32 to vector<1x128xi32>
    %8 = arith.cmpi eq, %0, %7 : vector<1x128xi32>
    %cst_4 = arith.constant 0.000000e+00 : f32
    %9 = vector.broadcast %cst_4 : f32 to vector<1x128xf32>
    %10 = arith.select %8, %4, %9 : vector<1x128xi1>, vector<1x128xf32>
    %11 = arith.addf %1, %10 : vector<1x128xf32>
    %c1 = arith.constant 1 : index
    %12 = memref.load %arg0[%c1] : memref<16xi32, #tpu.memory_space<smem>>
    %13 = arith.index_cast %12 : i32 to index
    %c0_5 = arith.constant 0 : index
    %14 = vector.load %arg2[%13, %c0_5] : memref<128x128xf32, #tpu.memory_space<vmem>>, vector<1x128xf32>
    %c1_6 = arith.constant 1 : index
    %c0_7 = arith.constant 0 : index
    %15 = vector.load %arg3[%c1_6, %c0_7] : memref<16x128xf32, #tpu.memory_space<vmem>>, vector<1x128xf32>
    tpu.vector_store %arg3[%c1_6, %c0_7], %14 {strides = array<i32>} : memref<16x128xf32, #tpu.memory_space<vmem>>, vector<1x128xf32>,
    %c1_8 = arith.constant 1 : index
    %16 = memref.load %arg1[%c1_8] : memref<16xi32, #tpu.memory_space<smem>>
    %17 = vector.broadcast %16 : i32 to vector<1x128xi32>
    %18 = arith.cmpi eq, %0, %17 : vector<1x128xi32>
    %cst_9 = arith.constant 0.000000e+00 : f32
    %19 = vector.broadcast %cst_9 : f32 to vector<1x128xf32>
    %20 = arith.select %18, %14, %19 : vector<1x128xi1>, vector<1x128xf32>
    %21 = arith.addf %11, %20 : vector<1x128xf32>
    %c2 = arith.constant 2 : index
    %22 = memref.load %arg0[%c2] : memref<16xi32, #tpu.memory_space<smem>>
    %23 = arith.index_cast %22 : i32 to index
    %c0_10 = arith.constant 0 : index
    %24 = vector.load %arg2[%23, %c0_10] : memref<128x128xf32, #tpu.memory_space<vmem>>, vector<1x128xf32>
    %c2_11 = arith.constant 2 : index
    %c0_12 = arith.constant 0 : index
    %25 = vector.load %arg3[%c2_11, %c0_12] : memref<16x128xf32, #tpu.memory_space<vmem>>, vector<1x128xf32>
    tpu.vector_store %arg3[%c2_11, %c0_12], %24 {strides = array<i32>} : memref<16x128xf32, #tpu.memory_space<vmem>>, vector<1x128xf32>,
    %c2_13 = arith.constant 2 : index
    %26 = memref.load %arg1[%c2_13] : memref<16xi32, #tpu.memory_space<smem>>
    %27 = vector.broadcast %26 : i32 to vector<1x128xi32>
    %28 = arith.cmpi eq, %0, %27 : vector<1x128xi32>
    %cst_14 = arith.constant 0.000000e+00 : f32
    %29 = vector.broadcast %cst_14 : f32 to vector<1x128xf32>
    %30 = arith.select %28, %24, %29 : vector<1x128xi1>, vector<1x128xf32>
    %31 = arith.addf %21, %30 : vector<1x128xf32>
    %c3 = arith.constant 3 : index
    %32 = memref.load %arg0[%c3] : memref<16xi32, #tpu.memory_space<smem>>
    %33 = arith.index_cast %32 : i32 to index
    %c0_15 = arith.constant 0 : index
    %34 = vector.load %arg2[%33, %c0_15] : memref<128x128xf32, #tpu.memory_space<vmem>>, vector<1x128xf32>
    %c3_16 = arith.constant 3 : index
    %c0_17 = arith.constant 0 : index
    %35 = vector.load %arg3[%c3_16, %c0_17] : memref<16x128xf32, #tpu.memory_space<vmem>>, vector<1x128xf32>
    tpu.vector_store %arg3[%c3_16, %c0_17], %34 {strides = array<i32>} : memref<16x128xf32, #tpu.memory_space<vmem>>, vector<1x128xf32>,
    %c3_18 = arith.constant 3 : index
    %36 = memref.load %arg1[%c3_18] : memref<16xi32, #tpu.memory_space<smem>>
    %37 = vector.broadcast %36 : i32 to vector<1x128xi32>
    %38 = arith.cmpi eq, %0, %37 : vector<1x128xi32>
    %cst_19 = arith.constant 0.000000e+00 : f32
    %39 = vector.broadcast %cst_19 : f32 to vector<1x128xf32>
    %40 = arith.select %38, %34, %39 : vector<1x128xi1>, vector<1x128xf32>
    %41 = arith.addf %31, %40 : vector<1x128xf32>
    %c4 = arith.constant 4 : index
    %42 = memref.load %arg0[%c4] : memref<16xi32, #tpu.memory_space<smem>>
    %43 = arith.index_cast %42 : i32 to index
    %c0_20 = arith.constant 0 : index
    %44 = vector.load %arg2[%43, %c0_20] : memref<128x128xf32, #tpu.memory_space<vmem>>, vector<1x128xf32>
    %c4_21 = arith.constant 4 : index
    %c0_22 = arith.constant 0 : index
    %45 = vector.load %arg3[%c4_21, %c0_22] : memref<16x128xf32, #tpu.memory_space<vmem>>, vector<1x128xf32>
    tpu.vector_store %arg3[%c4_21, %c0_22], %44 {strides = array<i32>} : memref<16x128xf32, #tpu.memory_space<vmem>>, vector<1x128xf32>,
    %c4_23 = arith.constant 4 : index
    %46 = memref.load %arg1[%c4_23] : memref<16xi32, #tpu.memory_space<smem>>
    %47 = vector.broadcast %46 : i32 to vector<1x128xi32>
    %48 = arith.cmpi eq, %0, %47 : vector<1x128xi32>
    %cst_24 = arith.constant 0.000000e+00 : f32
    %49 = vector.broadcast %cst_24 : f32 to vector<1x128xf32>
    %50 = arith.select %48, %44, %49 : vector<1x128xi1>, vector<1x128xf32>
    %51 = arith.addf %41, %50 : vector<1x128xf32>
    %c5 = arith.constant 5 : index
    %52 = memref.load %arg0[%c5] : memref<16xi32, #tpu.memory_space<smem>>
    %53 = arith.index_cast %52 : i32 to index
    %c0_25 = arith.constant 0 : index
    %54 = vector.load %arg2[%53, %c0_25] : memref<128x128xf32, #tpu.memory_space<vmem>>, vector<1x128xf32>
    %c5_26 = arith.constant 5 : index
    %c0_27 = arith.constant 0 : index
    %55 = vector.load %arg3[%c5_26, %c0_27] : memref<16x128xf32, #tpu.memory_space<vmem>>, vector<1x128xf32>
    tpu.vector_store %arg3[%c5_26, %c0_27], %54 {strides = array<i32>} : memref<16x128xf32, #tpu.memory_space<vmem>>, vector<1x128xf32>,
    %c5_28 = arith.constant 5 : index
    %56 = memref.load %arg1[%c5_28] : memref<16xi32, #tpu.memory_space<smem>>
    %57 = vector.broadcast %56 : i32 to vector<1x128xi32>
    %58 = arith.cmpi eq, %0, %57 : vector<1x128xi32>
    %cst_29 = arith.constant 0.000000e+00 : f32
    %59 = vector.broadcast %cst_29 : f32 to vector<1x128xf32>
    %60 = arith.select %58, %54, %59 : vector<1x128xi1>, vector<1x128xf32>
    %61 = arith.addf %51, %60 : vector<1x128xf32>
    %c6 = arith.constant 6 : index
    %62 = memref.load %arg0[%c6] : memref<16xi32, #tpu.memory_space<smem>>
    %63 = arith.index_cast %62 : i32 to index
    %c0_30 = arith.constant 0 : index
    %64 = vector.load %arg2[%63, %c0_30] : memref<128x128xf32, #tpu.memory_space<vmem>>, vector<1x128xf32>
    %c6_31 = arith.constant 6 : index
    %c0_32 = arith.constant 0 : index
    %65 = vector.load %arg3[%c6_31, %c0_32] : memref<16x128xf32, #tpu.memory_space<vmem>>, vector<1x128xf32>
    tpu.vector_store %arg3[%c6_31, %c0_32], %64 {strides = array<i32>} : memref<16x128xf32, #tpu.memory_space<vmem>>, vector<1x128xf32>,
    %c6_33 = arith.constant 6 : index
    %66 = memref.load %arg1[%c6_33] : memref<16xi32, #tpu.memory_space<smem>>
    %67 = vector.broadcast %66 : i32 to vector<1x128xi32>
    %68 = arith.cmpi eq, %0, %67 : vector<1x128xi32>
    %cst_34 = arith.constant 0.000000e+00 : f32
    %69 = vector.broadcast %cst_34 : f32 to vector<1x128xf32>
    %70 = arith.select %68, %64, %69 : vector<1x128xi1>, vector<1x128xf32>
    %71 = arith.addf %61, %70 : vector<1x128xf32>
    %c7 = arith.constant 7 : index
    %72 = memref.load %arg0[%c7] : memref<16xi32, #tpu.memory_space<smem>>
    %73 = arith.index_cast %72 : i32 to index
    %c0_35 = arith.constant 0 : index
    %74 = vector.load %arg2[%73, %c0_35] : memref<128x128xf32, #tpu.memory_space<vmem>>, vector<1x128xf32>
    %c7_36 = arith.constant 7 : index
    %c0_37 = arith.constant 0 : index
    %75 = vector.load %arg3[%c7_36, %c0_37] : memref<16x128xf32, #tpu.memory_space<vmem>>, vector<1x128xf32>
    tpu.vector_store %arg3[%c7_36, %c0_37], %74 {strides = array<i32>} : memref<16x128xf32, #tpu.memory_space<vmem>>, vector<1x128xf32>,
    %c7_38 = arith.constant 7 : index
    %76 = memref.load %arg1[%c7_38] : memref<16xi32, #tpu.memory_space<smem>>
    %77 = vector.broadcast %76 : i32 to vector<1x128xi32>
    %78 = arith.cmpi eq, %0, %77 : vector<1x128xi32>
    %cst_39 = arith.constant 0.000000e+00 : f32
    %79 = vector.broadcast %cst_39 : f32 to vector<1x128xf32>
    %80 = arith.select %78, %74, %79 : vector<1x128xi1>, vector<1x128xf32>
    %81 = arith.addf %71, %80 : vector<1x128xf32>
    %c8 = arith.constant 8 : index
    %82 = memref.load %arg0[%c8] : memref<16xi32, #tpu.memory_space<smem>>
    %83 = arith.index_cast %82 : i32 to index
    %c0_40 = arith.constant 0 : index
    %84 = vector.load %arg2[%83, %c0_40] : memref<128x128xf32, #tpu.memory_space<vmem>>, vector<1x128xf32>
    %c8_41 = arith.constant 8 : index
    %c0_42 = arith.constant 0 : index
    %85 = vector.load %arg3[%c8_41, %c0_42] : memref<16x128xf32, #tpu.memory_space<vmem>>, vector<1x128xf32>
    tpu.vector_store %arg3[%c8_41, %c0_42], %84 {strides = array<i32>} : memref<16x128xf32, #tpu.memory_space<vmem>>, vector<1x128xf32>,
    %c8_43 = arith.constant 8 : index
    %86 = memref.load %arg1[%c8_43] : memref<16xi32, #tpu.memory_space<smem>>
    %87 = vector.broadcast %86 : i32 to vector<1x128xi32>
    %88 = arith.cmpi eq, %0, %87 : vector<1x128xi32>
    %cst_44 = arith.constant 0.000000e+00 : f32
    %89 = vector.broadcast %cst_44 : f32 to vector<1x128xf32>
    %90 = arith.select %88, %84, %89 : vector<1x128xi1>, vector<1x128xf32>
    %91 = arith.addf %81, %90 : vector<1x128xf32>
    %c9 = arith.constant 9 : index
    %92 = memref.load %arg0[%c9] : memref<16xi32, #tpu.memory_space<smem>>
    %93 = arith.index_cast %92 : i32 to index
    %c0_45 = arith.constant 0 : index
    %94 = vector.load %arg2[%93, %c0_45] : memref<128x128xf32, #tpu.memory_space<vmem>>, vector<1x128xf32>
    %c9_46 = arith.constant 9 : index
    %c0_47 = arith.constant 0 : index
    %95 = vector.load %arg3[%c9_46, %c0_47] : memref<16x128xf32, #tpu.memory_space<vmem>>, vector<1x128xf32>
    tpu.vector_store %arg3[%c9_46, %c0_47], %94 {strides = array<i32>} : memref<16x128xf32, #tpu.memory_space<vmem>>, vector<1x128xf32>,
    %c9_48 = arith.constant 9 : index
    %96 = memref.load %arg1[%c9_48] : memref<16xi32, #tpu.memory_space<smem>>
    %97 = vector.broadcast %96 : i32 to vector<1x128xi32>
    %98 = arith.cmpi eq, %0, %97 : vector<1x128xi32>
    %cst_49 = arith.constant 0.000000e+00 : f32
    %99 = vector.broadcast %cst_49 : f32 to vector<1x128xf32>
    %100 = arith.select %98, %94, %99 : vector<1x128xi1>, vector<1x128xf32>
    %101 = arith.addf %91, %100 : vector<1x128xf32>
    %c10 = arith.constant 10 : index
    %102 = memref.load %arg0[%c10] : memref<16xi32, #tpu.memory_space<smem>>
    %103 = arith.index_cast %102 : i32 to index
    %c0_50 = arith.constant 0 : index
    %104 = vector.load %arg2[%103, %c0_50] : memref<128x128xf32, #tpu.memory_space<vmem>>, vector<1x128xf32>
    %c10_51 = arith.constant 10 : index
    %c0_52 = arith.constant 0 : index
    %105 = vector.load %arg3[%c10_51, %c0_52] : memref<16x128xf32, #tpu.memory_space<vmem>>, vector<1x128xf32>
    tpu.vector_store %arg3[%c10_51, %c0_52], %104 {strides = array<i32>} : memref<16x128xf32, #tpu.memory_space<vmem>>, vector<1x128xf32>,
    %c10_53 = arith.constant 10 : index
    %106 = memref.load %arg1[%c10_53] : memref<16xi32, #tpu.memory_space<smem>>
    %107 = vector.broadcast %106 : i32 to vector<1x128xi32>
    %108 = arith.cmpi eq, %0, %107 : vector<1x128xi32>
    %cst_54 = arith.constant 0.000000e+00 : f32
    %109 = vector.broadcast %cst_54 : f32 to vector<1x128xf32>
    %110 = arith.select %108, %104, %109 : vector<1x128xi1>, vector<1x128xf32>
    %111 = arith.addf %101, %110 : vector<1x128xf32>
    %c11 = arith.constant 11 : index
    %112 = memref.load %arg0[%c11] : memref<16xi32, #tpu.memory_space<smem>>
    %113 = arith.index_cast %112 : i32 to index
    %c0_55 = arith.constant 0 : index
    %114 = vector.load %arg2[%113, %c0_55] : memref<128x128xf32, #tpu.memory_space<vmem>>, vector<1x128xf32>
    %c11_56 = arith.constant 11 : index
    %c0_57 = arith.constant 0 : index
    %115 = vector.load %arg3[%c11_56, %c0_57] : memref<16x128xf32, #tpu.memory_space<vmem>>, vector<1x128xf32>
    tpu.vector_store %arg3[%c11_56, %c0_57], %114 {strides = array<i32>} : memref<16x128xf32, #tpu.memory_space<vmem>>, vector<1x128xf32>,
    %c11_58 = arith.constant 11 : index
    %116 = memref.load %arg1[%c11_58] : memref<16xi32, #tpu.memory_space<smem>>
    %117 = vector.broadcast %116 : i32 to vector<1x128xi32>
    %118 = arith.cmpi eq, %0, %117 : vector<1x128xi32>
    %cst_59 = arith.constant 0.000000e+00 : f32
    %119 = vector.broadcast %cst_59 : f32 to vector<1x128xf32>
    %120 = arith.select %118, %114, %119 : vector<1x128xi1>, vector<1x128xf32>
    %121 = arith.addf %111, %120 : vector<1x128xf32>
    %c12 = arith.constant 12 : index
    %122 = memref.load %arg0[%c12] : memref<16xi32, #tpu.memory_space<smem>>
    %123 = arith.index_cast %122 : i32 to index
    %c0_60 = arith.constant 0 : index
    %124 = vector.load %arg2[%123, %c0_60] : memref<128x128xf32, #tpu.memory_space<vmem>>, vector<1x128xf32>
    %c12_61 = arith.constant 12 : index
    %c0_62 = arith.constant 0 : index
    %125 = vector.load %arg3[%c12_61, %c0_62] : memref<16x128xf32, #tpu.memory_space<vmem>>, vector<1x128xf32>
    tpu.vector_store %arg3[%c12_61, %c0_62], %124 {strides = array<i32>} : memref<16x128xf32, #tpu.memory_space<vmem>>, vector<1x128xf32>,
    %c12_63 = arith.constant 12 : index
    %126 = memref.load %arg1[%c12_63] : memref<16xi32, #tpu.memory_space<smem>>
    %127 = vector.broadcast %126 : i32 to vector<1x128xi32>
    %128 = arith.cmpi eq, %0, %127 : vector<1x128xi32>
    %cst_64 = arith.constant 0.000000e+00 : f32
    %129 = vector.broadcast %cst_64 : f32 to vector<1x128xf32>
    %130 = arith.select %128, %124, %129 : vector<1x128xi1>, vector<1x128xf32>
    %131 = arith.addf %121, %130 : vector<1x128xf32>
    %c13 = arith.constant 13 : index
    %132 = memref.load %arg0[%c13] : memref<16xi32, #tpu.memory_space<smem>>
    %133 = arith.index_cast %132 : i32 to index
    %c0_65 = arith.constant 0 : index
    %134 = vector.load %arg2[%133, %c0_65] : memref<128x128xf32, #tpu.memory_space<vmem>>, vector<1x128xf32>
    %c13_66 = arith.constant 13 : index
    %c0_67 = arith.constant 0 : index
    %135 = vector.load %arg3[%c13_66, %c0_67] : memref<16x128xf32, #tpu.memory_space<vmem>>, vector<1x128xf32>
    tpu.vector_store %arg3[%c13_66, %c0_67], %134 {strides = array<i32>} : memref<16x128xf32, #tpu.memory_space<vmem>>, vector<1x128xf32>,
    %c13_68 = arith.constant 13 : index
    %136 = memref.load %arg1[%c13_68] : memref<16xi32, #tpu.memory_space<smem>>
    %137 = vector.broadcast %136 : i32 to vector<1x128xi32>
    %138 = arith.cmpi eq, %0, %137 : vector<1x128xi32>
    %cst_69 = arith.constant 0.000000e+00 : f32
    %139 = vector.broadcast %cst_69 : f32 to vector<1x128xf32>
    %140 = arith.select %138, %134, %139 : vector<1x128xi1>, vector<1x128xf32>
    %141 = arith.addf %131, %140 : vector<1x128xf32>
    %c14 = arith.constant 14 : index
    %142 = memref.load %arg0[%c14] : memref<16xi32, #tpu.memory_space<smem>>
    %143 = arith.index_cast %142 : i32 to index
    %c0_70 = arith.constant 0 : index
    %144 = vector.load %arg2[%143, %c0_70] : memref<128x128xf32, #tpu.memory_space<vmem>>, vector<1x128xf32>
    %c14_71 = arith.constant 14 : index
    %c0_72 = arith.constant 0 : index
    %145 = vector.load %arg3[%c14_71, %c0_72] : memref<16x128xf32, #tpu.memory_space<vmem>>, vector<1x128xf32>
    tpu.vector_store %arg3[%c14_71, %c0_72], %144 {strides = array<i32>} : memref<16x128xf32, #tpu.memory_space<vmem>>, vector<1x128xf32>,
    %c14_73 = arith.constant 14 : index
    %146 = memref.load %arg1[%c14_73] : memref<16xi32, #tpu.memory_space<smem>>
    %147 = vector.broadcast %146 : i32 to vector<1x128xi32>
    %148 = arith.cmpi eq, %0, %147 : vector<1x128xi32>
    %cst_74 = arith.constant 0.000000e+00 : f32
    %149 = vector.broadcast %cst_74 : f32 to vector<1x128xf32>
    %150 = arith.select %148, %144, %149 : vector<1x128xi1>, vector<1x128xf32>
    %151 = arith.addf %141, %150 : vector<1x128xf32>
    %c15 = arith.constant 15 : index
    %152 = memref.load %arg0[%c15] : memref<16xi32, #tpu.memory_space<smem>>
    %153 = arith.index_cast %152 : i32 to index
    %c0_75 = arith.constant 0 : index
    %154 = vector.load %arg2[%153, %c0_75] : memref<128x128xf32, #tpu.memory_space<vmem>>, vector<1x128xf32>
    %c15_76 = arith.constant 15 : index
    %c0_77 = arith.constant 0 : index
    %155 = vector.load %arg3[%c15_76, %c0_77] : memref<16x128xf32, #tpu.memory_space<vmem>>, vector<1x128xf32>
    tpu.vector_store %arg3[%c15_76, %c0_77], %154 {strides = array<i32>} : memref<16x128xf32, #tpu.memory_space<vmem>>, vector<1x128xf32>,
    %c15_78 = arith.constant 15 : index
    %156 = memref.load %arg1[%c15_78] : memref<16xi32, #tpu.memory_space<smem>>
    %157 = vector.broadcast %156 : i32 to vector<1x128xi32>
    %158 = arith.cmpi eq, %0, %157 : vector<1x128xi32>
    %cst_79 = arith.constant 0.000000e+00 : f32
    %159 = vector.broadcast %cst_79 : f32 to vector<1x128xf32>
    %160 = arith.select %158, %154, %159 : vector<1x128xi1>, vector<1x128xf32>
    %161 = arith.addf %151, %160 : vector<1x128xf32>
    %c0_80 = arith.constant 0 : index
    %c0_81 = arith.constant 0 : index
    %162 = vector.load %arg3[%c0_80, %c0_81] : memref<16x128xf32, #tpu.memory_space<vmem>>, vector<16x128xf32>
    %cst_82 = arith.constant dense<0xFF800000> : vector<16xf32>
    %163 = vector.multi_reduction <maximumf>, %162, %cst_82 [1] : vector<16x128xf32> to vector<16xf32>
    %164 = vector.shape_cast %163 : vector<16xf32> to vector<16x1xf32>
    %165 = vector.broadcast %164 : vector<16x1xf32> to vector<16x128xf32>
    %166 = arith.subf %162, %165 : vector<16x128xf32>
    %167 = math.exp %166 : vector<16x128xf32>
    %cst_83 = arith.constant dense<0.000000e+00> : vector<16xf32>
    %168 = vector.multi_reduction <add>, %167, %cst_83 [1] : vector<16x128xf32> to vector<16xf32>
    %169 = vector.shape_cast %168 : vector<16xf32> to vector<16x1xf32>
    %170 = math.log %169 : vector<16x1xf32>
    %171 = arith.addf %164, %170 : vector<16x1xf32>
    %172 = vector.shape_cast %171 : vector<16x1xf32> to vector<1x16x1xf32>
    %cst_84 = arith.constant dense<0.000000e+00> : vector<1xf32>
    %173 = vector.multi_reduction <add>, %172, %cst_84 [1, 2] : vector<1x16x1xf32> to vector<1xf32>
    %174 = vector.shape_cast %173 : vector<1xf32> to vector<1x1x1xf32>
    %175 = vector.extract %174[0, 0, 0] : f32 from vector<1x1x1xf32>
    %176 = vector.shape_cast %161 : vector<1x128xf32> to vector<1x1x128xf32>
    %cst_85 = arith.constant dense<0.000000e+00> : vector<1xf32>
    %177 = vector.multi_reduction <add>, %176, %cst_85 [1, 2] : vector<1x1x128xf32> to vector<1xf32>
    %178 = vector.shape_cast %177 : vector<1xf32> to vector<1x1x1xf32>
    %179 = vector.extract %178[0, 0, 0] : f32 from vector<1x1x1xf32>
    %180 = arith.subf %175, %179 : f32
    %cst_86 = arith.constant 6.250000e-02 : f32
    %181 = arith.mulf %180, %cst_86 : f32
    %c0_87 = arith.constant 0 : index
    %c0_88 = arith.constant 0 : index
    %182 = memref.load %arg4[%c0_87, %c0_88] : memref<1x1xf32, #tpu.memory_space<smem>>
    memref.store %181, %arg4[%c0_87, %c0_88] : memref<1x1xf32, #tpu.memory_space<smem>>
    return
  }
}

</mosaic_0001>

<llo_original>
// kernel: tpu_custom_call.1
$region0: #{tpu_custom_call.1}
  #allocation0 [shape = 'u32[]', space=smem, size = 0x4, offset = 0x4, fixed_abs, tag = 'smem constant byte address 0x4 - core index']
  #allocation1 [shape = 'u32[144,128]{1,0:T(1,128)}', space=vmem, size = 0x12000, scoped, tag = 'internal scratch']
  %s0 = inlined_call_operand.hbm [shape: s32[16], index: 0, kind: input, shape index: {}]
  %s1 = inlined_call_operand.vmem [shape: s32[16], index: 1, kind: input, shape index: {}]
  %s2 = inlined_call_operand.hbm [shape: f32[128,128], index: 2, kind: input, shape index: {}]
  %s3 = inlined_call_operand.hbm [shape: f32[16,128], index: 3, kind: output, shape index: {0}]
  %s4 = inlined_call_operand.hbm [shape: f32[1,1], index: 4, kind: output, shape index: {1}]
  %5 = xla_tuple %s3, %s4
  %s6 = sld [smem:[#allocation0]]
  $region42: #{tpu_custom_call.1} parent=0
    _
  %s8 = ssub.s32 1, %s6
  %s9 = scalar_select 0, %s8, %s6
  $region1: #{tpu_custom_call.1} parent=0
    #allocation2 [shape = 'u8[512]{0}', space=smem, size = 0x200, scoped, tag = 'input window, operand 0, single buffered']
    #allocation3 [shape = 's32[1]{0}', space=sflag, size = 0x4, scoped, tag = 'scoped memory for tpu_custom_call.1']
    #allocation4 [shape = 's32[1]{0}', space=sflag, size = 0x4, scoped, tag = 'scoped memory for tpu_custom_call.1']
    #allocation5 [shape = 's32[1]{0}', space=sflag, size = 0x4, scoped, tag = 'scoped memory for tpu_custom_call.1']
    #allocation6 [shape = 's32[1]{0}', space=sflag, size = 0x4, scoped, tag = 'scoped memory for tpu_custom_call.1']
    #allocation7 [shape = 's32[1]{0}', space=sflag, size = 0x4, scoped, tag = 'scoped memory for tpu_custom_call.1']
    #allocation8 [shape = 'u8[512]{0}', space=smem, size = 0x200, scoped, tag = 'input window, operand 1, single buffered']
    #allocation9 [shape = 'u8[65536]{0}', space=vmem, size = 0x10000, scoped, tag = 'input window, operand 2, single buffered']
    #allocation10 [shape = 'u8[8192]{0}', space=vmem, size = 0x2000, scoped, tag = 'output window, operand 0, single buffered']
    #allocation11 [shape = 'u8[512]{0}', space=smem, size = 0x200, scoped, tag = 'output window, operand 1, single buffered']
    %10 = vsyncpa [#allocation5], 0
    %11 = vsyncpa [#allocation7], 0
    %12 = vsyncpa [#allocation3], 0
    %13 = vsyncpa [#allocation4], 0
    %14 = vsyncpa [#allocation6], 0
    // Predicated region
    $region2: #{tpu_custom_call.1} parent=1 // pred_check
      _
    $region3: #{tpu_custom_call.1} parent=1 // pred_check_branch
      %16 = sbr.rel (0) target = $region5
    $region4: #{tpu_custom_call.1} parent=1 // pred_region
      %s18 = ssub.s32 16, 16
      %19 = vsyncadd [#allocation5], %s18
      %22 = dma.hbm_to_smem %s0, 16, [#allocation2], [#allocation5]
    $region5: #{tpu_custom_call.1} parent=1 // pred_fallthru
      _
    // Predicated region
    $region6: #{tpu_custom_call.1} parent=1 // pred_check
      _
    $region7: #{tpu_custom_call.1} parent=1 // pred_check_branch
      %24 = sbr.rel (0) target = $region9
    $region8: #{tpu_custom_call.1} parent=1 // pred_region
      %s26 = ssub.s32 16, 16
      %27 = vsyncadd [#allocation7], %s26
      %s29 = sshll.u32 %s1, 4
      %s30 = int_to_ptr.vmem [resolvable:$true] %s29
      %32 = dma.vmem_to_smem %s30, 16, [#allocation8], [#allocation7]
    $region9: #{tpu_custom_call.1} parent=1 // pred_fallthru
      _
    // Predicated region
    $region10: #{tpu_custom_call.1} parent=1 // pred_check
      _
    $region11: #{tpu_custom_call.1} parent=1 // pred_check_branch
      %34 = sbr.rel (0) target = $region13
    $region12: #{tpu_custom_call.1} parent=1 // pred_region
      %s36 = ssub.s32 2048, 2048
      %37 = vsyncadd [#allocation3], %s36
      %s38 = sshll.u32 [#allocation9], 4
      %s39 = int_to_ptr.vmem [resolvable:$true] %s38
      %44 = dma.hbm_to_vmem [thread:$0]  %s2, 2048, %s39, [#allocation3], 128, 128, 8
    $region13: #{tpu_custom_call.1} parent=1 // pred_fallthru
      _
    // Predicated region
    $region14: #{tpu_custom_call.1} parent=1 // pred_check
      _
    $region15: #{tpu_custom_call.1} parent=1 // pred_check_branch
      %46 = sbr.rel (0) target = $region17
    $region16: #{tpu_custom_call.1} parent=1 // pred_region
      %47 = dma.done [#allocation5], 16
    $region17: #{tpu_custom_call.1} parent=1 // pred_fallthru
      _
    // Predicated region
    $region18: #{tpu_custom_call.1} parent=1 // pred_check
      _
    $region19: #{tpu_custom_call.1} parent=1 // pred_check_branch
      %49 = sbr.rel (0) target = $region21
    $region20: #{tpu_custom_call.1} parent=1 // pred_region
      %50 = dma.done [#allocation7], 16
    $region21: #{tpu_custom_call.1} parent=1 // pred_fallthru
      _
    // Predicated region
    $region22: #{tpu_custom_call.1} parent=1 // pred_check
      _
    $region23: #{tpu_custom_call.1} parent=1 // pred_check_branch
      %52 = sbr.rel (0) target = $region25
    $region24: #{tpu_custom_call.1} parent=1 // pred_region
      %53 = dma.done [#allocation3], 2048
    $region25: #{tpu_custom_call.1} parent=1 // pred_fallthru
      _
    %54 = sfence
    %v55 = vlaneseq
    %v56 = vand.u32 %v55, 127
    %s57 = sld [smem:[#allocation2]]
    %s58 = scalar_lea.vmem [#allocation9], %s57
    %v59 = vld [vmem:[%s58] sm:$0x1]
    %60 = vst [vmem:[#allocation10] sm:$0x1] %v59
    %s61 = sld [smem:[#allocation8]]
    %v62 = vstv %s61
    %vm63 = vcmp.eq.s32.totalorder %v56, %v62
    %v64 = vsel %vm63, %v59, 0.0
    %v65 = vadd.f32 %v64, 0.0
    %s66 = sld [smem:[#allocation2 + $0x1]]
    %s67 = scalar_lea.vmem [#allocation9], %s66
    %v68 = vld [vmem:[%s67] sm:$0x1]
    %69 = vst [vmem:[#allocation10 + $0x1] sm:$0x1] %v68
    %s70 = sld [smem:[#allocation8 + $0x1]]
    %v71 = vstv %s70
    %vm72 = vcmp.eq.s32.totalorder %v56, %v71
    %v73 = vsel %vm72, %v68, 0.0
    %v74 = vadd.f32 %v65, %v73
    %s75 = sld [smem:[#allocation2 + $0x2]]
    %s76 = scalar_lea.vmem [#allocation9], %s75
    %v77 = vld [vmem:[%s76] sm:$0x1]
    %78 = vst [vmem:[#allocation10 + $0x2] sm:$0x1] %v77
    %s79 = sld [smem:[#allocation8 + $0x2]]
    %v80 = vstv %s79
    %vm81 = vcmp.eq.s32.totalorder %v56, %v80
    %v82 = vsel %vm81, %v77, 0.0
    %v83 = vadd.f32 %v74, %v82
    %s84 = sld [smem:[#allocation2 + $0x3]]
    %s85 = scalar_lea.vmem [#allocation9], %s84
    %v86 = vld [vmem:[%s85] sm:$0x1]
    %87 = vst [vmem:[#allocation10 + $0x3] sm:$0x1] %v86
    %s88 = sld [smem:[#allocation8 + $0x3]]
    %v89 = vstv %s88
    %vm90 = vcmp.eq.s32.totalorder %v56, %v89
    %v91 = vsel %vm90, %v86, 0.0
    %v92 = vadd.f32 %v83, %v91
    %s93 = sld [smem:[#allocation2 + $0x4]]
    %s94 = scalar_lea.vmem [#allocation9], %s93
    %v95 = vld [vmem:[%s94] sm:$0x1]
    %96 = vst [vmem:[#allocation10 + $0x4] sm:$0x1] %v95
    %s97 = sld [smem:[#allocation8 + $0x4]]
    %v98 = vstv %s97
    %vm99 = vcmp.eq.s32.totalorder %v56, %v98
    %v100 = vsel %vm99, %v95, 0.0
    %v101 = vadd.f32 %v92, %v100
    %s102 = sld [smem:[#allocation2 + $0x5]]
    %s103 = scalar_lea.vmem [#allocation9], %s102
    %v104 = vld [vmem:[%s103] sm:$0x1]
    %105 = vst [vmem:[#allocation10 + $0x5] sm:$0x1] %v104
    %s106 = sld [smem:[#allocation8 + $0x5]]
    %v107 = vstv %s106
    %vm108 = vcmp.eq.s32.totalorder %v56, %v107
    %v109 = vsel %vm108, %v104, 0.0
    %v110 = vadd.f32 %v101, %v109
    %s111 = sld [smem:[#allocation2 + $0x6]]
    %s112 = scalar_lea.vmem [#allocation9], %s111
    %v113 = vld [vmem:[%s112] sm:$0x1]
    %114 = vst [vmem:[#allocation10 + $0x6] sm:$0x1] %v113
    %s115 = sld [smem:[#allocation8 + $0x6]]
    %v116 = vstv %s115
    %vm117 = vcmp.eq.s32.totalorder %v56, %v116
    %v118 = vsel %vm117, %v113, 0.0
    %v119 = vadd.f32 %v110, %v118
    %s120 = sld [smem:[#allocation2 + $0x7]]
    %s121 = scalar_lea.vmem [#allocation9], %s120
    %v122 = vld [vmem:[%s121] sm:$0x1]
    %123 = vst [vmem:[#allocation10 + $0x7] sm:$0x1] %v122
    %s124 = sld [smem:[#allocation8 + $0x7]]
    %v125 = vstv %s124
    %vm126 = vcmp.eq.s32.totalorder %v56, %v125
    %v127 = vsel %vm126, %v122, 0.0
    %v128 = vadd.f32 %v119, %v127
    %s129 = sld [smem:[#allocation2 + $0x8]]
    %s130 = scalar_lea.vmem [#allocation9], %s129
    %v131 = vld [vmem:[%s130] sm:$0x1]
    %132 = vst [vmem:[#allocation10 + $0x8] sm:$0x1] %v131
    %s133 = sld [smem:[#allocation8 + $0x8]]
    %v134 = vstv %s133
    %vm135 = vcmp.eq.s32.totalorder %v56, %v134
    %v136 = vsel %vm135, %v131, 0.0
    %v137 = vadd.f32 %v128, %v136
    %s138 = sld [smem:[#allocation2 + $0x9]]
    %s139 = scalar_lea.vmem [#allocation9], %s138
    %v140 = vld [vmem:[%s139] sm:$0x1]
    %141 = vst [vmem:[#allocation10 + $0x9] sm:$0x1] %v140
    %s142 = sld [smem:[#allocation8 + $0x9]]
    %v143 = vstv %s142
    %vm144 = vcmp.eq.s32.totalorder %v56, %v143
    %v145 = vsel %vm144, %v140, 0.0
    %v146 = vadd.f32 %v137, %v145
    %s147 = sld [smem:[#allocation2 + $0xa]]
    %s148 = scalar_lea.vmem [#allocation9], %s147
    %v149 = vld [vmem:[%s148] sm:$0x1]
    %150 = vst [vmem:[#allocation10 + $0xa] sm:$0x1] %v149
    %s151 = sld [smem:[#allocation8 + $0xa]]
    %v152 = vstv %s151
    %vm153 = vcmp.eq.s32.totalorder %v56, %v152
    %v154 = vsel %vm153, %v149, 0.0
    %v155 = vadd.f32 %v146, %v154
    %s156 = sld [smem:[#allocation2 + $0xb]]
    %s157 = scalar_lea.vmem [#allocation9], %s156
    %v158 = vld [vmem:[%s157] sm:$0x1]
    %159 = vst [vmem:[#allocation10 + $0xb] sm:$0x1] %v158
    %s160 = sld [smem:[#allocation8 + $0xb]]
    %v161 = vstv %s160
    %vm162 = vcmp.eq.s32.totalorder %v56, %v161
    %v163 = vsel %vm162, %v158, 0.0
    %v164 = vadd.f32 %v155, %v163
    %s165 = sld [smem:[#allocation2 + $0xc]]
    %s166 = scalar_lea.vmem [#allocation9], %s165
    %v167 = vld [vmem:[%s166] sm:$0x1]
    %168 = vst [vmem:[#allocation10 + $0xc] sm:$0x1] %v167
    %s169 = sld [smem:[#allocation8 + $0xc]]
    %v170 = vstv %s169
    %vm171 = vcmp.eq.s32.totalorder %v56, %v170
    %v172 = vsel %vm171, %v167, 0.0
    %v173 = vadd.f32 %v164, %v172
    %s174 = sld [smem:[#allocation2 + $0xd]]
    %s175 = scalar_lea.vmem [#allocation9], %s174
    %v176 = vld [vmem:[%s175] sm:$0x1]
    %177 = vst [vmem:[#allocation10 + $0xd] sm:$0x1] %v176
    %s178 = sld [smem:[#allocation8 + $0xd]]
    %v179 = vstv %s178
    %vm180 = vcmp.eq.s32.totalorder %v56, %v179
    %v181 = vsel %vm180, %v176, 0.0
    %v182 = vadd.f32 %v173, %v181
    %s183 = sld [smem:[#allocation2 + $0xe]]
    %s184 = scalar_lea.vmem [#allocation9], %s183
    %v185 = vld [vmem:[%s184] sm:$0x1]
    %186 = vst [vmem:[#allocation10 + $0xe] sm:$0x1] %v185
    %s187 = sld [smem:[#allocation8 + $0xe]]
    %v188 = vstv %s187
    %vm189 = vcmp.eq.s32.totalorder %v56, %v188
    %v190 = vsel %vm189, %v185, 0.0
    %v191 = vadd.f32 %v182, %v190
    %s192 = sld [smem:[#allocation2 + $0xf]]
    %s193 = scalar_lea.vmem [#allocation9], %s192
    %v194 = vld [vmem:[%s193] sm:$0x1]
    %195 = vst [vmem:[#allocation10 + $0xf] sm:$0x1] %v194
    %s196 = sld [smem:[#allocation8 + $0xf]]
    %v197 = vstv %s196
    %vm198 = vcmp.eq.s32.totalorder %v56, %v197
    %v199 = vsel %vm198, %v194, 0.0
    %v200 = vadd.f32 %v191, %v199
    %v201 = vld [vmem:[#allocation10] sm:$0xff]
    %v202 = vld [vmem:[#allocation10 + $0x8] sm:$0xff]
    %203 = vmax.xlane.f32.xlu0 %v201
    %v204 = vpop.xlane.xlu0 %203
    %205 = vmax.xlane.f32.xlu0 %v202
    %v206 = vpop.xlane.xlu0 %205
    %v207 = vsub.f32 %v201, %v204
    %v208 = vsub.f32 %v202, %v206
    %v209 = vmul.f32 %v207, 1.442695
    %v210 = vpow.pop %v209
    %v211 = vmul.f32 %v208, 1.442695
    %v212 = vpow.pop %v211
    %213 = vadd.xlane.f32.xlu0 %v210
    %v214 = vpop.xlane.xlu0 %213
    %215 = vadd.xlane.f32.xlu0 %v212
    %v216 = vpop.xlane.xlu0 %215
    %v217 = vlog2.pop %v214
    %v218 = vmul.f32 %v217, 0.6931472
    %v219 = vlog2.pop %v216
    %v220 = vmul.f32 %v219, 0.6931472
    %v221 = vadd.f32 %v204, %v218
    %v222 = vadd.f32 %v206, %v220
    %vm223 = vcmask 7168
    %v224 = vsel %vm223, %v221, 0.0
    %v225 = vsel %vm223, %v222, 0.0
    %v226 = vadd.f32 %v224, %v225
    %227 = vadd.xlane.f32.xlu0 %v226
    %v228 = vpop.xlane.xlu0 %227
    %v229 = vrot.slane %v228, 4
    %v230 = vadd.f32 %v228, %v229
    %v231 = vrot.slane %v230, 2
    %v232 = vadd.f32 %v230, %v231
    %v233 = vrot.slane %v232, 1
    %v234 = vadd.f32 %v232, %v233
    %s235 = vtos %v234
    %vm236 = vcmask 1040384
    %v237 = vsel %vm236, %v200, 0.0
    %238 = vadd.xlane.f32.xlu0 %v237
    %v239 = vpop.xlane.xlu0 %238
    %v240 = vrot.slane %v239, 4
    %v241 = vadd.f32 %v239, %v240
    %v242 = vrot.slane %v241, 2
    %v243 = vadd.f32 %v241, %v242
    %v244 = vrot.slane %v243, 1
    %v245 = vadd.f32 %v243, %v244
    %s246 = vtos %v245
    %s247 = ssub.f32 %s235, %s246
    %s248 = smul.f32 %s247, 0.0625
    %s249 = scalar_lea.smem [#allocation11], 0
    %250 = sst [smem:[%s249]] %s248
    // Predicated region
    $region26: #{tpu_custom_call.1} parent=1 // pred_check
      _
    $region27: #{tpu_custom_call.1} parent=1 // pred_check_branch
      %252 = sbr.rel (0) target = $region29
    $region28: #{tpu_custom_call.1} parent=1 // pred_region
      %s254 = ssub.s32 256, 256
      %255 = vsyncadd [#allocation4], %s254
      %s256 = sshll.u32 [#allocation10], 4
      %s257 = int_to_ptr.vmem [resolvable:$true] %s256
      %262 = dma.vmem_to_hbm [thread:$0]  %s257, 256, %s3, [#allocation4], 128, 128, 8
    $region29: #{tpu_custom_call.1} parent=1 // pred_fallthru
      _
    // Predicated region
    $region30: #{tpu_custom_call.1} parent=1 // pred_check
      _
    $region31: #{tpu_custom_call.1} parent=1 // pred_check_branch
      %264 = sbr.rel (0) target = $region33
    $region32: #{tpu_custom_call.1} parent=1 // pred_region
      %s266 = ssub.s32 16, 16
      %267 = vsyncadd [#allocation6], %s266
      %270 = dma.smem_to_hbm [#allocation11], 16, %s4, [#allocation6]
    $region33: #{tpu_custom_call.1} parent=1 // pred_fallthru
      _
    // Predicated region
    $region34: #{tpu_custom_call.1} parent=1 // pred_check
      _
    $region35: #{tpu_custom_call.1} parent=1 // pred_check_branch
      %272 = sbr.rel (0) target = $region37
    $region36: #{tpu_custom_call.1} parent=1 // pred_region
      %273 = dma.done [#allocation4], 256
    $region37: #{tpu_custom_call.1} parent=1 // pred_fallthru
      _
    // Predicated region
    $region38: #{tpu_custom_call.1} parent=1 // pred_check
      _
    $region39: #{tpu_custom_call.1} parent=1 // pred_check_branch
      %275 = sbr.rel (0) target = $region41
    $region40: #{tpu_custom_call.1} parent=1 // pred_region
      %276 = dma.done [#allocation6], 16
    $region41: #{tpu_custom_call.1} parent=1 // pred_fallthru
      _
    %277 = sfence
    %278 = vsyncpa [#allocation3], 1
    %279 = vsyncpa [#allocation4], 1
    %280 = vsyncpa [#allocation5], 1
    %281 = vsyncpa [#allocation6], 1
    %282 = vsyncpa [#allocation7], 1

</llo_original>
